<compile_context>
chip_gen: v7x
topology: tpu7x:2x2x1
jax: 0.10.0
libtpu: 0.0.40
codegen_flags: <defaults>
</compile_context>

<pallas_src>
import functools

import jax
import jax.numpy as jnp
from jax.experimental import pallas as pl
from jax.experimental.pallas import tpu as pltpu


def _round_up(v: int, a: int) -> int:
    return ((v + a - 1) // a) * a


def _cdiv(a: int, b: int) -> int:
    return (a + b - 1) // b


def _vmem_budget_bytes() -> int:
    """Generation-aware usable-VMEM budget (headroom left for the compiler)."""
    phys = 64 << 20  # conservative default = v7x physical VMEM per TensorCore
    try:
        phys = int(pltpu.get_tpu_info().vmem_capacity_bytes)
    except Exception:
        pass
    # ~48 MiB on v7x (64 MiB physical), capped near ~100 MiB on v5e/v6e (128 MiB).
    return int(max(min(phys - (16 << 20), 100 << 20), 24 << 20))


# ---------------------------------------------------------------------------
# Fast path: full-K, full-T single-pass GEMM.  One grid axis over M tiles.
# ---------------------------------------------------------------------------
def _head_kernel(x_ref, wt_ref, b_ref, o_ref, *, compute_dtype):
    # x_ref : [tm, nf]  block i of flattened X
    # wt_ref: [nf, Tw]  whole transposed weight (grid-invariant -> fetched once)
    # b_ref : [1,  Tw]  bias (f32, grid-invariant)
    # o_ref : [tm, Tw]  block i of the output
    x = x_ref[...]
    w = wt_ref[...]
    if compute_dtype is not None:
        # In-kernel cast: X crosses HBM exactly once in its original dtype.
        if x.dtype != compute_dtype:
            x = x.astype(compute_dtype)
        if w.dtype != compute_dtype:
            w = w.astype(compute_dtype)
    acc = jnp.dot(x, w, preferred_element_type=jnp.float32)
    o_ref[...] = (acc + b_ref[...]).astype(o_ref.dtype)


# ---------------------------------------------------------------------------
# Fallback: K-tiled (very large nf or caller-forced tk).  Grid = (M, K).
# ---------------------------------------------------------------------------
def _head_kernel_ktiled_accum_out(x_ref, wt_ref, b_ref, o_ref, *, compute_dtype):
    # f32 output block is resident across k and doubles as the accumulator.
    k = pl.program_id(1)
    x = x_ref[...]
    w = wt_ref[...]
    if compute_dtype is not None:
        if x.dtype != compute_dtype:
            x = x.astype(compute_dtype)
        if w.dtype != compute_dtype:
            w = w.astype(compute_dtype)

    @pl.when(k == 0)
    def _():
        o_ref[...] = jnp.broadcast_to(b_ref[...], o_ref.shape)

    o_ref[...] += jnp.dot(x, w, preferred_element_type=jnp.float32)


def _head_kernel_ktiled_scratch(x_ref, wt_ref, b_ref, o_ref, acc_ref, *, compute_dtype):
    # Non-f32 outputs: accumulate in an f32 scratch, cast once in the epilogue.
    k = pl.program_id(1)
    x = x_ref[...]
    w = wt_ref[...]
    if compute_dtype is not None:
        if x.dtype != compute_dtype:
            x = x.astype(compute_dtype)
        if w.dtype != compute_dtype:
            w = w.astype(compute_dtype)

    @pl.when(k == 0)
    def _():
        acc_ref[...] = jnp.zeros_like(acc_ref)

    acc_ref[...] += jnp.dot(x, w, preferred_element_type=jnp.float32)

    @pl.when(k == pl.num_programs(1) - 1)
    def _():
        o_ref[...] = (acc_ref[...] + b_ref[...]).astype(o_ref.dtype)


def _pick_tm(M, tm_req, max_tm):
    """Balanced M tiling; >=2 blocks when M allows (keeps both v7x TCs busy)."""
    n_blk = _cdiv(M, max(1, min(tm_req, max_tm)))
    if M >= 16:
        n_blk = max(n_blk, 2)
    if n_blk <= 1:
        return M  # single full-dim block: no (8,128) constraint, no padding
    tm_ = min(_round_up(_cdiv(M, n_blk), 8), _round_up(M, 8))
    return tm_


def flatten_head_forward(
    x,                       # [B, n_vars, d_model, patch_num]
    weight_t,                # [nf, Tw] pre-transposed Linear weight (Tw may be lane-padded)
    bias,                    # [Tw]
    *,
    target_window=None,      # logical output width; defaults to Tw
    compute_dtype=None,      # e.g. jnp.bfloat16 -> MXU operands cast in-kernel
    tm=None,                 # requested row tile (auto if None)
    tk=None,                 # force K tiling with this reduction tile (auto full-K)
):
    """x: [B, n_vars, d_model, patch_num] -> [B, n_vars, target_window]."""
    B, n_vars, d_model, patch_num = x.shape
    nf = d_model * patch_num
    M = B * n_vars
    nf_w, Tw = weight_t.shape
    assert nf_w == nf, f"weight_t must be [nf={nf}, Tw], got {weight_t.shape}"
    assert bias.shape == (Tw,)
    T = Tw if target_window is None else int(target_window)
    assert 0 < T <= Tw
    out_dtype = x.dtype

    # Flatten(start_dim=-2): contiguous row-major merge -> free reshape, no copy.
    x2d = x.reshape(M, nf)
    b2d = bias.astype(jnp.float32).reshape(1, Tw)   # tiny

    x_bytes = jnp.dtype(x2d.dtype).itemsize
    w_bytes = jnp.dtype(weight_t.dtype).itemsize
    o_bytes = jnp.dtype(out_dtype).itemsize
    budget = _vmem_budget_bytes()
    margin = 4 << 20

    # Double-buffered bias footprint in VMEM (padded to (8, 128k)).
    bias_vmem = 2 * 8 * _round_up(Tw, 128) * 4
    # Resident weight footprint (double-buffered; fetched from HBM only once).
    resident_full_k = 2 * nf * Tw * w_bytes + bias_vmem
    per_row_full_k = 2 * (nf * x_bytes + Tw * o_bytes)
    full_k_ok = (tk is None or tk >= nf) and (
        resident_full_k + 8 * per_row_full_k + margin <= budget
    )

    if full_k_ok:
        # ------------------------- fast path --------------------------------
        max_tm = max(8, (budget - resident_full_k - margin) // per_row_full_k)
        tm_ = _pick_tm(M, 1024 if tm is None else tm, max_tm)
        grid_m = _cdiv(M, tm_)

        est = 2 * tm_ * nf * x_bytes + resident_full_k + 2 * tm_ * Tw * o_bytes
        vmem_limit = int(min(budget, max(est + margin, 32 << 20)))

        kernel = functools.partial(_head_kernel, compute_dtype=compute_dtype)
        out2d = pl.pallas_call(
            kernel,
            out_shape=jax.ShapeDtypeStruct((M, Tw), out_dtype),
            grid_spec=pltpu.PrefetchScalarGridSpec(
                num_scalar_prefetch=0,
                grid=(grid_m,),
                in_specs=[
                    pl.BlockSpec((tm_, nf), lambda i: (i, 0)),
                    # Grid-invariant blocks: DMA'd once, resident across all M tiles.
                    pl.BlockSpec((nf, Tw), lambda i: (0, 0)),
                    pl.BlockSpec((1, Tw), lambda i: (0, 0)),
                ],
                out_specs=pl.BlockSpec((tm_, Tw), lambda i: (i, 0)),
            ),
            compiler_params=pltpu.CompilerParams(
                dimension_semantics=("parallel",),
                vmem_limit_bytes=vmem_limit,
            ),
        )(x2d, weight_t, b2d)
    else:
        # --------------------- K-tiled fallback path -------------------------
        tk_req = nf if tk is None else int(tk)
        nkb = max(1, _cdiv(nf, max(128, tk_req)))
        tk_ = _round_up(_cdiv(nf, nkb), 128)          # balanced reduction tile
        nfp = tk_ * _cdiv(nf, tk_)
        wt = weight_t
        if nfp != nf:
            # Zero-pad the reduction axis (exact). Rare path; only taken when
            # nf is too large for a single resident block anyway.
            x2d = jnp.pad(x2d, ((0, 0), (0, nfp - nf)))
            wt = jnp.pad(wt, ((0, nfp - nf), (0, 0)))

        accumulate_in_out = out_dtype == jnp.float32
        resident = 2 * tk_ * Tw * w_bytes + bias_vmem
        per_row = 2 * (tk_ * x_bytes + Tw * o_bytes) + (0 if accumulate_in_out else Tw * 4)
        max_tm = max(8, (budget - resident - margin) // per_row)
        tm_ = _pick_tm(M, 512 if tm is None else tm, max_tm)
        grid = (_cdiv(M, tm_), nfp // tk_)

        est = (2 * tm_ * tk_ * x_bytes + resident + 2 * tm_ * Tw * o_bytes
               + (0 if accumulate_in_out else tm_ * Tw * 4))
        vmem_limit = int(min(budget, max(est + margin, 32 << 20)))

        if accumulate_in_out:
            kernel = functools.partial(_head_kernel_ktiled_accum_out,
                                       compute_dtype=compute_dtype)
            scratch_shapes = []
        else:
            kernel = functools.partial(_head_kernel_ktiled_scratch,
                                       compute_dtype=compute_dtype)
            scratch_shapes = [pltpu.VMEM((tm_, Tw), jnp.float32)]

        out2d = pl.pallas_call(
            kernel,
            out_shape=jax.ShapeDtypeStruct((M, Tw), out_dtype),
            grid_spec=pltpu.PrefetchScalarGridSpec(
                num_scalar_prefetch=0,
                grid=grid,
                in_specs=[
                    pl.BlockSpec((tm_, tk_), lambda i, k: (i, k)),
                    pl.BlockSpec((tk_, Tw), lambda i, k: (k, 0)),
                    pl.BlockSpec((1, Tw), lambda i, k: (0, 0)),
                ],
                out_specs=pl.BlockSpec((tm_, Tw), lambda i, k: (i, 0)),
                scratch_shapes=scratch_shapes,
            ),
            compiler_params=pltpu.CompilerParams(
                dimension_semantics=("parallel", "arbitrary"),
                vmem_limit_bytes=vmem_limit,
            ),
        )(x2d, wt, b2d)

    # Slice off any lane padding (Tw > T).  Dropout(p=0)/inference is identity.
    out2d = out2d if Tw == T else out2d[:, :T]
    return out2d.reshape(B, n_vars, T)


if __name__ == "__main__":
    # Small, module-consistent shapes.
    B, n_vars, d_model, patch_num = 2, 4, 16, 16
    nf = d_model * patch_num          # 256
    target_window = 32

    key = jax.random.PRNGKey(0)
    kx, kw, kb = jax.random.split(key, 3)

    x = jax.random.normal(kx, (B, n_vars, d_model, patch_num), dtype=jnp.float32)
    # nn.Linear(nf, target_window) params in PyTorch layout [T, nf] / [T].
    weight = (jax.random.uniform(kw, (target_window, nf), dtype=jnp.float32) - 0.5) * 0.1
    bias = (jax.random.uniform(kb, (target_window,), dtype=jnp.float32) - 0.5) * 0.1

    # One-time "parameter load" work (off the hot path): transpose, and
    # lane-pad the small operands so the kernel's output stores are lane-dense.
    Tp = _round_up(target_window, 128)
    weight_t = jnp.zeros((nf, Tp), jnp.float32).at[:, :target_window].set(weight.T)
    bias_p = jnp.zeros((Tp,), jnp.float32).at[:target_window].set(bias)
    weight_t_bf16 = weight_t.astype(jnp.bfloat16)

    ref = x.reshape(B, n_vars, nf) @ weight.T + bias

    # 1) Fast path: single-pass full-K / full-T GEMM, f32 operands.
    out = flatten_head_forward(x, weight_t, bias_p, target_window=target_window)
    jax.block_until_ready(out)
    assert out.shape == (B, n_vars, target_window)
    assert jnp.allclose(out, ref, atol=1e-5, rtol=1e-5)

    # 1b) Same with an un-padded weight (full-dim lane block, masked stores).
    out_np = flatten_head_forward(x, jnp.asarray(weight.T), bias)
    jax.block_until_ready(out_np)
    assert jnp.allclose(out_np, ref, atol=1e-5, rtol=1e-5)

    # 2) Multi-block M: exercises the "parallel" M grid (>= 2 blocks for v7x).
    xb = jax.random.normal(kx, (8, 8, d_model, patch_num), dtype=jnp.float32)  # M = 64
    refb = xb.reshape(8, 8, nf) @ weight.T + bias
    outb = flatten_head_forward(xb, weight_t, bias_p, target_window=target_window, tm=16)
    jax.block_until_ready(outb)
    assert jnp.allclose(outb, refb, atol=1e-5, rtol=1e-5)

    # 3) bf16 MXU operands: in-kernel cast of X, pre-cast weight, f32 accumulate.
    out_bf16 = flatten_head_forward(
        x, weight_t_bf16, bias_p, target_window=target_window,
        compute_dtype=jnp.bfloat16)
    jax.block_until_ready(out_bf16)
    assert jnp.allclose(out_bf16, ref, atol=3e-2, rtol=3e-2)

    # 4) Forced K-tiled fallback (f32 output -> accumulate directly into o_ref).
    out_kt = flatten_head_forward(x, weight_t, bias_p, target_window=target_window, tk=128)
    jax.block_until_ready(out_kt)
    assert jnp.allclose(out_kt, ref, atol=1e-5, rtol=1e-5)

    # 5) Forced K-tiled fallback with a non-f32 output (f32 scratch accumulator).
    x_bf = x.astype(jnp.bfloat16)
    out_kt_bf = flatten_head_forward(
        x_bf, weight_t_bf16, bias_p, target_window=target_window, tk=128)
    jax.block_until_ready(out_kt_bf)
    assert jnp.allclose(out_kt_bf.astype(jnp.float32), ref, atol=5e-2, rtol=5e-2)

    print("KERNEL_OK")
</pallas_src>

<mosaic_0001>
module attributes {stable_mosaic.version = 11 : i64} {
  func.func @_head_kernel(%arg0: i32, %arg1: memref<8x256xf32, #tpu.memory_space<vmem>>, %arg2: memref<256x128xf32, #tpu.memory_space<vmem>>, %arg3: memref<1x128xf32, #tpu.memory_space<vmem>>, %arg4: memref<8x128xf32, #tpu.memory_space<vmem>>) attributes {dimension_semantics = [#tpu.dimension_semantics<parallel>], iteration_bounds = array<i64: 1>, scalar_prefetch = 0 : i64, scratch_operands = 0 : i64, tpu.core_type = #tpu.core_type<tc>, window_params = [{transform_indices = @transform_0, window_bounds = array<i64: 8, 256>}, {pipeline_mode = #tpu.pipeline_mode<synchronous>, transform_indices = @transform_1, window_bounds = array<i64: 256, 128>}, {pipeline_mode = #tpu.pipeline_mode<synchronous>, transform_indices = @transform_2, window_bounds = array<i64: 1, 128>}, {transform_indices = @transform_3, window_bounds = array<i64: 8, 128>}]} {
    %c0 = arith.constant 0 : index
    %c0_0 = arith.constant 0 : index
    %0 = vector.load %arg1[%c0, %c0_0] : memref<8x256xf32, #tpu.memory_space<vmem>>, vector<8x256xf32>
    %c0_1 = arith.constant 0 : index
    %c0_2 = arith.constant 0 : index
    %1 = vector.load %arg2[%c0_1, %c0_2] : memref<256x128xf32, #tpu.memory_space<vmem>>, vector<256x128xf32>
    %cst = arith.constant dense<0.000000e+00> : vector<8x128xf32>
    %2 = tpu.matmul %0, %1, %cst {dimension_numbers = #tpu.dot_dimension_numbers<[1], [0], [0], [1], [0, 0, 1, 1], [], []>} : vector<8x256xf32>, vector<256x128xf32>, vector<8x128xf32> -> vector<8x128xf32>
    %c0_3 = arith.constant 0 : index
    %c0_4 = arith.constant 0 : index
    %3 = vector.load %arg3[%c0_3, %c0_4] : memref<1x128xf32, #tpu.memory_space<vmem>>, vector<1x128xf32>
    %4 = vector.broadcast %3 : vector<1x128xf32> to vector<8x128xf32>
    %5 = arith.addf %2, %4 : vector<8x128xf32>
    %c0_5 = arith.constant 0 : index
    %c0_6 = arith.constant 0 : index
    %6 = vector.load %arg4[%c0_5, %c0_6] : memref<8x128xf32, #tpu.memory_space<vmem>>, vector<8x128xf32>
    tpu.vector_store %arg4[%c0_5, %c0_6], %5 {strides = array<i32>} : memref<8x128xf32, #tpu.memory_space<vmem>>, vector<8x128xf32>,
    return
  }
  func.func @transform_0(%arg0: i32) -> (i32, i32) {
    %c0_i32 = arith.constant 0 : i32
    %c0_i32_0 = arith.constant 0 : i32
    return %arg0, %c0_i32 : i32, i32
  }
  func.func @transform_1(%arg0: i32) -> (i32, i32) {
    %c0_i32 = arith.constant 0 : i32
    %c0_i32_0 = arith.constant 0 : i32
    %c0_i32_1 = arith.constant 0 : i32
    return %c0_i32, %c0_i32_0 : i32, i32
  }
  func.func @transform_2(%arg0: i32) -> (i32, i32) {
    %c0_i32 = arith.constant 0 : i32
    %c0_i32_0 = arith.constant 0 : i32
    %c0_i32_1 = arith.constant 0 : i32
    return %c0_i32, %c0_i32_0 : i32, i32
  }
  func.func @transform_3(%arg0: i32) -> (i32, i32) {
    %c0_i32 = arith.constant 0 : i32
    %c0_i32_0 = arith.constant 0 : i32
    return %arg0, %c0_i32 : i32, i32
  }
}

</mosaic_0001>

<llo_original>
// kernel: tpu_custom_call.1
$region0: #{tpu_custom_call.1}
  #allocation0 [shape = 'u32[]', space=smem, size = 0x4, offset = 0x4, fixed_abs, tag = 'smem constant byte address 0x4 - core index']
  #allocation1 [shape = 'u32[144,128]{1,0:T(1,128)}', space=vmem, size = 0x12000, scoped, tag = 'internal scratch']
  %s0 = inlined_call_operand.hbm [shape: f32[8,256], index: 0, kind: input, shape index: {}]
  %s1 = inlined_call_operand.hbm [shape: f32[256,128], index: 1, kind: input, shape index: {}]
  %s2 = inlined_call_operand.vmem [shape: f32[1,128], index: 2, kind: input, shape index: {}]
  %s3 = inlined_call_operand.hbm [shape: f32[8,128], index: 3, kind: output, shape index: {}]
  %s4 = sld [smem:[#allocation0]]
  $region30: #{tpu_custom_call.1} parent=0
    _
  %s6 = ssub.s32 1, %s4
  %s7 = scalar_select 0, %s6, %s4
  $region1: #{tpu_custom_call.1} parent=0
    #allocation2 [shape = 'u8[8192]{0}', space=vmem, size = 0x2000, scoped, tag = 'input window, operand 0, single buffered']
    #allocation3 [shape = 's32[1]{0}', space=sflag, size = 0x4, scoped, tag = 'scoped memory for tpu_custom_call.1']
    #allocation4 [shape = 's32[1]{0}', space=sflag, size = 0x4, scoped, tag = 'scoped memory for tpu_custom_call.1']
    #allocation5 [shape = 'u8[131072]{0}', space=vmem, size = 0x20000, scoped, tag = 'input window, operand 1, single buffered']
    #allocation6 [shape = 's32[1]{0}', space=sflag, size = 0x4, scoped, tag = 'scoped memory for tpu_custom_call.1']
    #allocation7 [shape = 'u8[4096]{0}', space=vmem, size = 0x1000, scoped, tag = 'output window, operand 0, single buffered']
    %8 = vsyncpa [#allocation3], 0
    %9 = vsyncpa [#allocation6], 0
    %10 = vsyncpa [#allocation4], 0
    // Predicated region
    $region2: #{tpu_custom_call.1} parent=1 // pred_check
      _
    $region3: #{tpu_custom_call.1} parent=1 // pred_check_branch
      %12 = sbr.rel (0) target = $region5
    $region4: #{tpu_custom_call.1} parent=1 // pred_region
      %s14 = ssub.s32 256, 256
      %15 = vsyncadd [#allocation3], %s14
      %s17 = sshll.u32 [#allocation2], 4
      %s18 = int_to_ptr.vmem [resolvable:$true] %s17
      %20 = dma.hbm_to_vmem [thread:$0]  %s0, 256, %s18, [#allocation3]
    $region5: #{tpu_custom_call.1} parent=1 // pred_fallthru
      _
    // Predicated region
    $region6: #{tpu_custom_call.1} parent=1 // pred_check
      _
    $region7: #{tpu_custom_call.1} parent=1 // pred_check_branch
      %22 = sbr.rel (0) target = $region9
    $region8: #{tpu_custom_call.1} parent=1 // pred_region
      %s24 = ssub.s32 4096, 4096
      %25 = vsyncadd [#allocation6], %s24
      %s26 = sshll.u32 [#allocation5], 4
      %s27 = int_to_ptr.vmem [resolvable:$true] %s26
      %32 = dma.hbm_to_vmem [thread:$0]  %s1, 4096, %s27, [#allocation6], 128, 128, 8
    $region9: #{tpu_custom_call.1} parent=1 // pred_fallthru
      _
    // Predicated region
    $region10: #{tpu_custom_call.1} parent=1 // pred_check
      _
    $region11: #{tpu_custom_call.1} parent=1 // pred_check_branch
      %34 = sbr.rel (0) target = $region13
    $region12: #{tpu_custom_call.1} parent=1 // pred_region
      _
    $region13: #{tpu_custom_call.1} parent=1 // pred_fallthru
      _
    // Predicated region
    $region14: #{tpu_custom_call.1} parent=1 // pred_check
      _
    $region15: #{tpu_custom_call.1} parent=1 // pred_check_branch
      %36 = sbr.rel (0) target = $region17
    $region16: #{tpu_custom_call.1} parent=1 // pred_region
      %37 = dma.done [#allocation3], 256
    $region17: #{tpu_custom_call.1} parent=1 // pred_fallthru
      _
    // Predicated region
    $region18: #{tpu_custom_call.1} parent=1 // pred_check
      _
    $region19: #{tpu_custom_call.1} parent=1 // pred_check_branch
      %39 = sbr.rel (0) target = $region21
    $region20: #{tpu_custom_call.1} parent=1 // pred_region
      %40 = dma.done [#allocation6], 4096
    $region21: #{tpu_custom_call.1} parent=1 // pred_fallthru
      _
    %v41 = vld [vmem:[#allocation2] sm:$0xff]
    %v42 = vld [vmem:[#allocation2 + $0x8] sm:$0xff]
    %v43 = vld [vmem:[#allocation5] sm:$0xff]
    %v44 = vld [vmem:[#allocation5 + $0x8] sm:$0xff]
    %v45 = vld [vmem:[#allocation5 + $0x10] sm:$0xff]
    %v46 = vld [vmem:[#allocation5 + $0x18] sm:$0xff]
    %v47 = vld [vmem:[#allocation5 + $0x20] sm:$0xff]
    %v48 = vld [vmem:[#allocation5 + $0x28] sm:$0xff]
    %v49 = vld [vmem:[#allocation5 + $0x30] sm:$0xff]
    %v50 = vld [vmem:[#allocation5 + $0x38] sm:$0xff]
    %v51 = vld [vmem:[#allocation5 + $0x40] sm:$0xff]
    %v52 = vld [vmem:[#allocation5 + $0x48] sm:$0xff]
    %v53 = vld [vmem:[#allocation5 + $0x50] sm:$0xff]
    %v54 = vld [vmem:[#allocation5 + $0x58] sm:$0xff]
    %v55 = vld [vmem:[#allocation5 + $0x60] sm:$0xff]
    %v56 = vld [vmem:[#allocation5 + $0x68] sm:$0xff]
    %v57 = vld [vmem:[#allocation5 + $0x70] sm:$0xff]
    %v58 = vld [vmem:[#allocation5 + $0x78] sm:$0xff]
    %v59 = vld [vmem:[#allocation5 + $0x80] sm:$0xff]
    %v60 = vld [vmem:[#allocation5 + $0x88] sm:$0xff]
    %v61 = vld [vmem:[#allocation5 + $0x90] sm:$0xff]
    %v62 = vld [vmem:[#allocation5 + $0x98] sm:$0xff]
    %v63 = vld [vmem:[#allocation5 + $0xa0] sm:$0xff]
    %v64 = vld [vmem:[#allocation5 + $0xa8] sm:$0xff]
    %v65 = vld [vmem:[#allocation5 + $0xb0] sm:$0xff]
    %v66 = vld [vmem:[#allocation5 + $0xb8] sm:$0xff]
    %v67 = vld [vmem:[#allocation5 + $0xc0] sm:$0xff]
    %v68 = vld [vmem:[#allocation5 + $0xc8] sm:$0xff]
    %v69 = vld [vmem:[#allocation5 + $0xd0] sm:$0xff]
    %v70 = vld [vmem:[#allocation5 + $0xd8] sm:$0xff]
    %v71 = vld [vmem:[#allocation5 + $0xe0] sm:$0xff]
    %v72 = vld [vmem:[#allocation5 + $0xe8] sm:$0xff]
    %v73 = vld [vmem:[#allocation5 + $0xf0] sm:$0xff]
    %v74 = vld [vmem:[#allocation5 + $0xf8] sm:$0xff]
    %v75 = vld [vmem:[%s2] sm:$0x1]
    %v77 = vlaneseq
    %v78 = vshrl.u32 %v77, 7
    %v79 = vsub.s32 0, %v78
    %v80 = vrot.slane %v75, %v79
    %82 = vmatprep.subr.mxu0 0.0
    %83 = vmatpush1.msra.mxu0 %v43
    %84 = vmatprep.subr.mxu0 0.0
    %85 = vmatpush1.msra.mxu0 %v44
    %86 = vmatprep.subr.mxu0 0.0
    %87 = vmatpush1.msra.mxu0 %v45
    %88 = vmatprep.subr.mxu0 0.0
    %89 = vmatpush1.msra.mxu0 %v46
    %90 = vmatprep.subr.mxu0 0.0
    %91 = vmatpush1.msra.mxu0 %v47
    %92 = vmatprep.subr.mxu0 0.0
    %93 = vmatpush1.msra.mxu0 %v48
    %94 = vmatprep.subr.mxu0 0.0
    %95 = vmatpush1.msra.mxu0 %v49
    %96 = vmatprep.subr.mxu0 0.0
    %97 = vmatpush1.msra.mxu0 %v50
    %98 = vmatprep.subr.mxu0 0.0
    %99 = vmatpush1.msra.mxu0 %v51
    %100 = vmatprep.subr.mxu0 0.0
    %101 = vmatpush1.msra.mxu0 %v52
    %102 = vmatprep.subr.mxu0 0.0
    %103 = vmatpush1.msra.mxu0 %v53
    %104 = vmatprep.subr.mxu0 0.0
    %105 = vmatpush1.msra.mxu0 %v54
    %106 = vmatprep.subr.mxu0 0.0
    %107 = vmatpush1.msra.mxu0 %v55
    %108 = vmatprep.subr.mxu0 0.0
    %109 = vmatpush1.msra.mxu0 %v56
    %110 = vmatprep.subr.mxu0 0.0
    %111 = vmatpush1.msra.mxu0 %v57
    %112 = vmatprep.subr.mxu0 0.0
    %113 = vmatpush1.msra.mxu0 %v58
    %114 = vmatprep.subr.mxu0 0.0
    %115 = vmatpush1.msra.mxu0 %v59
    %116 = vmatprep.subr.mxu0 0.0
    %117 = vmatpush1.msra.mxu0 %v60
    %118 = vmatprep.subr.mxu0 0.0
    %119 = vmatpush1.msra.mxu0 %v61
    %120 = vmatprep.subr.mxu0 0.0
    %121 = vmatpush1.msra.mxu0 %v62
    %122 = vmatprep.subr.mxu0 0.0
    %123 = vmatpush1.msra.mxu0 %v63
    %124 = vmatprep.subr.mxu0 0.0
    %125 = vmatpush1.msra.mxu0 %v64
    %126 = vmatprep.subr.mxu0 0.0
    %127 = vmatpush1.msra.mxu0 %v65
    %128 = vmatprep.subr.mxu0 0.0
    %129 = vmatpush1.msra.mxu0 %v66
    %130 = vmatprep.subr.mxu0 0.0
    %131 = vmatpush1.msra.mxu0 %v67
    %132 = vmatprep.subr.mxu0 0.0
    %133 = vmatpush1.msra.mxu0 %v68
    %134 = vmatprep.subr.mxu0 0.0
    %135 = vmatpush1.msra.mxu0 %v69
    %136 = vmatprep.subr.mxu0 0.0
    %137 = vmatpush1.msra.mxu0 %v70
    %138 = vmatprep.subr.mxu0 0.0
    %139 = vmatpush1.msra.mxu0 %v71
    %140 = vmatprep.subr.mxu0 0.0
    %141 = vmatpush1.msra.mxu0 %v72
    %142 = vmatprep.subr.mxu0 0.0
    %143 = vmatpush1.msra.mxu0 %v73
    %144 = vmatprep.subr.mxu0 0.0
    %145 = vmatpush1.msra.mxu0 %v74
    %146 = vmatprep.mubr.f32.mxu0 %v42
    %147 = vmatmul.mubr.f32.gmra.mrb[0].mxu0 %v41
    %v148 = vpop.f32.mrb[0].mxu0
    %v149 = vadd.f32 %v80, %v148
    %v150 = vpop.f32.mrb[0].mxu0
    %151 = vdwg.mxu0
    %152 = vst [vmem:[#allocation7] sm:$0xff] %v149
    // Predicated region
    $region22: #{tpu_custom_call.1} parent=1 // pred_check
      _
    $region23: #{tpu_custom_call.1} parent=1 // pred_check_branch
      %154 = sbr.rel (0) target = $region25
    $region24: #{tpu_custom_call.1} parent=1 // pred_region
      %s156 = ssub.s32 128, 128
      %157 = vsyncadd [#allocation4], %s156
      %s159 = sshll.u32 [#allocation7], 4
      %s160 = int_to_ptr.vmem [resolvable:$true] %s159
      %162 = dma.vmem_to_hbm [thread:$0]  %s160, 128, %s3, [#allocation4]
    $region25: #{tpu_custom_call.1} parent=1 // pred_fallthru
      _
    // Predicated region
    $region26: #{tpu_custom_call.1} parent=1 // pred_check
      _
    $region27: #{tpu_custom_call.1} parent=1 // pred_check_branch
      %164 = sbr.rel (0) target = $region29
    $region28: #{tpu_custom_call.1} parent=1 // pred_region
      %165 = dma.done [#allocation4], 128
    $region29: #{tpu_custom_call.1} parent=1 // pred_fallthru
      _
    %166 = vsyncpa [#allocation3], 1
    %167 = vsyncpa [#allocation6], 1
    %168 = vsyncpa [#allocation4], 1

</llo_original>
